<compile_context>
chip_gen: v5e
topology: v5e:2x2
jax: 0.10.0
libtpu: 0.0.40
codegen_flags: <defaults>
</compile_context>

<pallas_src>
import functools

import jax
import jax.numpy as jnp
from jax.experimental import pallas as pl
from jax.experimental.pallas import tpu as pltpu


def _lite_attention_kernel(x_ref, wt_ref, b_ref, o_ref, *, bf16_matmul):
    # x_ref : (TB, S, D)   TB batch elements, full feature dim (matmul input)
    # wt_ref: (D, TD)      pre-transposed Linear weight slice (W^T columns)
    # b_ref : (1, TD)      bias slice
    # o_ref : (TB, S, TD)
    TB, S, D = x_ref.shape
    TD = o_ref.shape[-1]

    x = x_ref[...]
    x2 = x.reshape(TB * S, D)           # free relayout when S % 8 == 0
    wt = wt_ref[...]
    if bf16_matmul:
        x2 = x2.astype(jnp.bfloat16)
        wt = wt.astype(jnp.bfloat16)

    # y = x @ W^T + b  — W^T supplied directly, so the contraction is a plain
    # (lhs last dim) x (rhs first dim) MXU matmul with f32 accumulation and no
    # per-step weight transpose.
    y2 = jnp.dot(x2, wt, preferred_element_type=jnp.float32) + b_ref[...]
    y = y2.reshape(TB, S, TD)

    # Softmax over the sequence axis (axis=1 of the original (B, S, D) input).
    y_max = jnp.max(y, axis=1, keepdims=True)        # (TB, 1, TD)
    e = jnp.exp(y - y_max)                           # (TB, S, TD)
    inv = pl.reciprocal(jnp.sum(e, axis=1, keepdims=True), approx=True)  # EUP

    # Hadamard with the matching feature slice of the input; fused epilogue
    # (no materialized `attn` temporary).
    if TD == D:
        x_h = x
    else:
        di = pl.program_id(1)
        x_h = x_ref[:, :, pl.ds(pl.multiple_of(di * TD, TD), TD)]
    o_ref[...] = (x_h * e * inv).astype(o_ref.dtype)


def _vmem_capacity_bytes():
    # Narrow guard around the hardware query only; a failure falls back to the
    # most conservative per-core figure (v7x: 64 MiB).
    try:
        return int(pltpu.get_tpu_info().vmem_capacity_bytes)
    except Exception:
        return 64 * 2**20


def _pick_td(D):
    """Output-feature tile: full D unless D is large and 128-aligned."""
    if D <= 1024 or D % 128 != 0:
        return D
    for cand in (512, 256, 128):
        if D % cand == 0:
            return cand
    return D


_SLAB_CAP_BYTES = 2 * 2**20   # per-step x slab: ~roofline plateau, cheap DMA overlap
_MIN_GRID_B = 4               # keep >=4 batch steps (pipelining; 2 TCs on v7x)


def _pick_tb(B, S, D, itemsize):
    """Largest divisor of B that keeps the x slab small and the grid deep."""
    best = 1
    for tb in range(1, B + 1):
        if B % tb:
            continue
        if B // tb < min(_MIN_GRID_B, B):
            continue
        if tb > 1 and tb * S * D * itemsize > _SLAB_CAP_BYTES:
            continue
        best = max(best, tb)
    return best


@functools.lru_cache(maxsize=None)
def _build_call(B, S, D, dtype, TB, TD, bf16_matmul):
    grid_b = B // TB
    grid_d = D // TD
    itemsize = jnp.dtype(dtype).itemsize

    # Per-step working set: double-buffered x/out/weight/bias blocks plus the
    # f32 softmax intermediates. Cap the scoped limit at 3/4 of this
    # generation's physical VMEM (48 MiB on v7x, 96 MiB on v5e/v6e).
    ws = (itemsize * (2 * TB * S * D + 2 * TB * S * TD + 2 * (D * TD + TD))
          + 4 * 3 * TB * S * TD)
    vmem_cap = _vmem_capacity_bytes()
    vmem_limit = int(min(max(32 * 2**20, 2 * ws), (vmem_cap * 3) // 4))

    kernel = functools.partial(_lite_attention_kernel, bf16_matmul=bf16_matmul)
    return pl.pallas_call(
        kernel,
        out_shape=jax.ShapeDtypeStruct((B, S, D), dtype),
        grid_spec=pltpu.PrefetchScalarGridSpec(
            num_scalar_prefetch=0,
            grid=(grid_b, grid_d),
            in_specs=[
                # x: TB batch elements, full feature dim (matmul needs all D).
                pl.BlockSpec((TB, S, D), lambda bi, di: (bi, 0, 0)),
                # Pre-transposed weight, tiled over output features.
                pl.BlockSpec((D, TD), lambda bi, di: (0, di)),
                # Bias slice.
                pl.BlockSpec((1, TD), lambda bi, di: (0, di)),
            ],
            out_specs=pl.BlockSpec((TB, S, TD), lambda bi, di: (bi, 0, di)),
        ),
        compiler_params=pltpu.CompilerParams(
            # di kept "arbitrary": sequential per core, so the constant-index x
            # block is fetched from HBM once per batch step.
            dimension_semantics=("parallel", "arbitrary"),
            vmem_limit_bytes=vmem_limit,
        ),
    )


def lite_attention(x, w, b, *, bf16_matmul=False):
    """x: (B, S, D); w: (D, D) torch nn.Linear weight (out, in); b: (D,)."""
    B, S, D = x.shape
    TD = _pick_td(D)
    TB = _pick_tb(B, S, D, jnp.dtype(x.dtype).itemsize)
    # TODO(synk): tile S with an online softmax for very long sequences where
    # even a TB=1 slab exceeds the VMEM budget.
    fn = _build_call(B, S, D, jnp.dtype(x.dtype), TB, TD, bool(bf16_matmul))
    wt = jnp.transpose(w)          # one-time D x D transpose in HBM
    return fn(x, wt, b.reshape(1, D))


def lite_attention_ref(x, w, b):
    """Pure-JAX reference mirroring the PyTorch module."""
    y = jnp.einsum("bsd,ed->bse", x, w) + b        # nn.Linear on last dim
    attn = jax.nn.softmax(y, axis=1)               # nn.Softmax(dim=1)
    return x * attn


if __name__ == "__main__":
    B, S, D = 2, 8, 32

    key = jax.random.PRNGKey(0)
    kx, kw, kb = jax.random.split(key, 3)

    x = jax.random.normal(kx, (B, S, D), dtype=jnp.float32)
    # Deterministic "Linear(dim, dim, bias=True)" params (Kaiming-uniform-ish).
    bound = 1.0 / (D ** 0.5)
    w = jax.random.uniform(kw, (D, D), minval=-bound, maxval=bound, dtype=jnp.float32)
    b = jax.random.uniform(kb, (D,), minval=-bound, maxval=bound, dtype=jnp.float32)

    fn = jax.jit(lite_attention)
    out = jax.block_until_ready(fn(x, w, b))
    ref = lite_attention_ref(x, w, b)

    assert out.shape == (B, S, D)
    # approx reciprocal in the softmax normalization -> slightly looser tol.
    assert jnp.allclose(out, ref, atol=3e-3, rtol=3e-3), "mismatch vs reference"

    print("KERNEL_OK")
</pallas_src>

<mosaic_0001>
module attributes {stable_mosaic.version = 11 : i64} {
  func.func @_lite_attention_kernel(%arg0: i32, %arg1: i32, %arg2: memref<1x8x32xf32, #tpu.memory_space<vmem>>, %arg3: memref<32x32xf32, #tpu.memory_space<vmem>>, %arg4: memref<1x32xf32, #tpu.memory_space<vmem>>, %arg5: memref<1x8x32xf32, #tpu.memory_space<vmem>>) attributes {dimension_semantics = [#tpu.dimension_semantics<parallel>, #tpu.dimension_semantics<arbitrary>], iteration_bounds = array<i64: 2, 1>, scalar_prefetch = 0 : i64, scratch_operands = 0 : i64, tpu.core_type = #tpu.core_type<tc>, window_params = [{transform_indices = @transform_0, window_bounds = array<i64: 1, 8, 32>}, {transform_indices = @transform_1, window_bounds = array<i64: 32, 32>}, {transform_indices = @transform_2, window_bounds = array<i64: 1, 32>}, {transform_indices = @transform_3, window_bounds = array<i64: 1, 8, 32>}]} {
    %c0 = arith.constant 0 : index
    %c0_0 = arith.constant 0 : index
    %c0_1 = arith.constant 0 : index
    %0 = vector.load %arg2[%c0, %c0_0, %c0_1] : memref<1x8x32xf32, #tpu.memory_space<vmem>>, vector<1x8x32xf32>
    %1 = vector.shape_cast %0 : vector<1x8x32xf32> to vector<8x32xf32>
    %c0_2 = arith.constant 0 : index
    %c0_3 = arith.constant 0 : index
    %2 = vector.load %arg3[%c0_2, %c0_3] : memref<32x32xf32, #tpu.memory_space<vmem>>, vector<32x32xf32>
    %cst = arith.constant dense<0.000000e+00> : vector<8x32xf32>
    %3 = tpu.matmul %1, %2, %cst {dimension_numbers = #tpu.dot_dimension_numbers<[1], [0], [0], [1], [0, 0, 1, 1], [], []>} : vector<8x32xf32>, vector<32x32xf32>, vector<8x32xf32> -> vector<8x32xf32>
    %c0_4 = arith.constant 0 : index
    %c0_5 = arith.constant 0 : index
    %4 = vector.load %arg4[%c0_4, %c0_5] : memref<1x32xf32, #tpu.memory_space<vmem>>, vector<1x32xf32>
    %5 = vector.broadcast %4 : vector<1x32xf32> to vector<8x32xf32>
    %6 = arith.addf %3, %5 : vector<8x32xf32>
    %7 = vector.shape_cast %6 : vector<8x32xf32> to vector<1x8x32xf32>
    %cst_6 = arith.constant dense<0xFF800000> : vector<1x32xf32>
    %8 = vector.multi_reduction <maximumf>, %7, %cst_6 [1] : vector<1x8x32xf32> to vector<1x32xf32>
    %9 = vector.shape_cast %8 : vector<1x32xf32> to vector<1x1x32xf32>
    %10 = vector.broadcast %9 : vector<1x1x32xf32> to vector<1x8x32xf32>
    %11 = arith.subf %7, %10 : vector<1x8x32xf32>
    %12 = math.exp %11 : vector<1x8x32xf32>
    %cst_7 = arith.constant dense<0.000000e+00> : vector<1x32xf32>
    %13 = vector.multi_reduction <add>, %12, %cst_7 [1] : vector<1x8x32xf32> to vector<1x32xf32>
    %14 = vector.shape_cast %13 : vector<1x32xf32> to vector<1x1x32xf32>
    %15 = tpu.reciprocal %14 {approx = true} : vector<1x1x32xf32> -> vector<1x1x32xf32>
    %16 = arith.mulf %0, %12 : vector<1x8x32xf32>
    %17 = vector.broadcast %15 : vector<1x1x32xf32> to vector<1x8x32xf32>
    %18 = arith.mulf %16, %17 : vector<1x8x32xf32>
    %c0_8 = arith.constant 0 : index
    %c0_9 = arith.constant 0 : index
    %c0_10 = arith.constant 0 : index
    %19 = vector.load %arg5[%c0_8, %c0_9, %c0_10] : memref<1x8x32xf32, #tpu.memory_space<vmem>>, vector<1x8x32xf32>
    tpu.vector_store %arg5[%c0_8, %c0_9, %c0_10], %18 {strides = array<i32>} : memref<1x8x32xf32, #tpu.memory_space<vmem>>, vector<1x8x32xf32>,
    return
  }
  func.func @transform_0(%arg0: i32, %arg1: i32) -> (i32, i32, i32) {
    %c0_i32 = arith.constant 0 : i32
    %c0_i32_0 = arith.constant 0 : i32
    %c0_i32_1 = arith.constant 0 : i32
    return %arg0, %c0_i32, %c0_i32_0 : i32, i32, i32
  }
  func.func @transform_1(%arg0: i32, %arg1: i32) -> (i32, i32) {
    %c0_i32 = arith.constant 0 : i32
    %c0_i32_0 = arith.constant 0 : i32
    return %c0_i32, %arg1 : i32, i32
  }
  func.func @transform_2(%arg0: i32, %arg1: i32) -> (i32, i32) {
    %c0_i32 = arith.constant 0 : i32
    %c0_i32_0 = arith.constant 0 : i32
    return %c0_i32, %arg1 : i32, i32
  }
  func.func @transform_3(%arg0: i32, %arg1: i32) -> (i32, i32, i32) {
    %c0_i32 = arith.constant 0 : i32
    %c0_i32_0 = arith.constant 0 : i32
    return %arg0, %c0_i32, %arg1 : i32, i32, i32
  }
}

</mosaic_0001>

<llo_original>
// kernel: lite_attention.1
$region0: #{lite_attention.1}
  #allocation0 [shape = 'u32[]', space=smem, size = 0x4, offset = 0x4, fixed_abs, tag = 'smem constant byte address 0x4 - core index']
  #allocation1 [shape = 'u32[72,128]{1,0:T(1,128)}', space=vmem, size = 0x9000, scoped, tag = 'internal scratch']
  %s0 = inlined_call_operand.vmem [shape: f32[2,8,32], index: 0, kind: input, shape index: {}]
  %s1 = inlined_call_operand.vmem [shape: f32[32,32], index: 1, kind: input, shape index: {}]
  %s2 = inlined_call_operand.vmem [shape: f32[1,32], index: 2, kind: input, shape index: {}]
  %s3 = inlined_call_operand.hbm [shape: f32[2,8,32], index: 3, kind: output, shape index: {}]
  %s4 = sld [smem:[#allocation0]]
  $region45: #{lite_attention.1} parent=0
    _
  %s6 = ssub.s32 1, %s4
  %s7 = scalar_select 0, %s6, %s4
  $region1: #{lite_attention.1} parent=0
    #allocation2 [shape = 'u8[8192]{0}', space=vmem, size = 0x2000, scoped, tag = 'output window, operand 0']
    #allocation3 [shape = 's32[2]{0}', space=sflag, size = 0x8, scoped, tag = 'scoped memory for lite_attention.1']
    %8 = vsyncpa [#allocation3], 0
    %s9 = scalar_lea.sflag [#allocation3], 1
    %10 = vsyncpa %s9, 0
    loop: start=0, step=1, limit=4
    $region2: #{lite_attention.1} parent=1 // loop_pre_header
      _
    $region3: #{lite_attention.1} parent=1 // loop_header
      %s12 = sphi 0, %s16
      %p13 = scmp.ge.s32.totalorder %s12, 4
      %s19 = sphi 0, %s31
      %s20 = sphi 0, %s27
      %s21 = sphi 0, %s19
      %s22 = sphi 0, %s20
      %s23 = sphi 0, %s21
      %s24 = sphi 0, %s22
      %s34 = sphi 0, %s36
      %s37 = sphi 0, %s34
      %s38 = sphi 0, %s37
      %s54 = sphi 0, %s38
      %s60 = sphi 0, %s62
      %s63 = sphi 0, %s60
      %s64 = sphi 0, %s63
      %s80 = sphi 0, %s64
      %s86 = sphi 0, %s88
      %s89 = sphi 0, %s86
      %s90 = sphi 0, %s89
      %s106 = sphi 0, %s90
      %s114 = sphi 0, %s116
      %s117 = sphi 0, %s114
      %s118 = sphi 0, %s117
      %s134 = sphi 0, %s118
    $region4: #{lite_attention.1} parent=1 // loop_header_branch
      %15 = sbr.rel (%p13) target = $region8
    $region5: #{lite_attention.1} parent=1 // loop_body
      %s17 = ssub.s32 %s12, 1
      %s18 = ssub.s32 %s12, 2
      %s25 = sadd.s32 1, %s20
      %p26 = scmp.ge.s32.totalorder %s25, 1
      %s27 = scalar_select %p26, 0, %s25
      %s28 = sadd.s32 1, %s19
      %s29 = scalar_select %p26, %s28, %s19
      %p30 = scmp.ge.s32.totalorder %s29, 2
      %s31 = scalar_select %p30, 0, %s29
      %s32 = ssub.s32 %s19, %s31
      %p33 = scmp.eq.s32.totalorder %s32, 0
      %s35 = sadd.s32 %s34, 1
      %s36 = scalar_select %p33, %s34, %s35
      %p39 = pneg %p33
      %p40 = scmp.eq.s32.totalorder %s12, 1
      %p41 = por %p39, %p40
      %p42 = scmp.ne.s32.totalorder %s34, %s37
      %p43 = scmp.eq.s32.totalorder %s12, 0
      %p44 = por %p42, %p43
      %p45 = scmp.ne.s32.totalorder %s34, %s37
      %p46 = scmp.eq.s32.totalorder %s17, 1
      %p47 = por %p45, %p46
      %p48 = scmp.ne.s32.totalorder %s37, %s38
      %p49 = scmp.eq.s32.totalorder %s17, 0
      %p50 = por %p48, %p49
      %p51 = scmp.ne.s32.totalorder %s37, %s38
      %p52 = scmp.eq.s32.totalorder %s18, 1
      %p53 = por %p51, %p52
      %p55 = scmp.ne.s32.totalorder %s38, %s54
      %p56 = scmp.eq.s32.totalorder %s18, 0
      %p57 = por %p55, %p56
      %s58 = ssub.s32 %s20, %s27
      %p59 = scmp.eq.s32.totalorder %s58, 0
      %s61 = sadd.s32 %s60, 1
      %s62 = scalar_select %p59, %s60, %s61
      %p65 = pneg %p59
      %p66 = scmp.eq.s32.totalorder %s12, 1
      %p67 = por %p65, %p66
      %p68 = scmp.ne.s32.totalorder %s60, %s63
      %p69 = scmp.eq.s32.totalorder %s12, 0
      %p70 = por %p68, %p69
      %p71 = scmp.ne.s32.totalorder %s60, %s63
      %p72 = scmp.eq.s32.totalorder %s17, 1
      %p73 = por %p71, %p72
      %p74 = scmp.ne.s32.totalorder %s63, %s64
      %p75 = scmp.eq.s32.totalorder %s17, 0
      %p76 = por %p74, %p75
      %p77 = scmp.ne.s32.totalorder %s63, %s64
      %p78 = scmp.eq.s32.totalorder %s18, 1
      %p79 = por %p77, %p78
      %p81 = scmp.ne.s32.totalorder %s64, %s80
      %p82 = scmp.eq.s32.totalorder %s18, 0
      %p83 = por %p81, %p82
      %s84 = ssub.s32 %s20, %s27
      %p85 = scmp.eq.s32.totalorder %s84, 0
      %s87 = sadd.s32 %s86, 1
      %s88 = scalar_select %p85, %s86, %s87
      %p91 = pneg %p85
      %p92 = scmp.eq.s32.totalorder %s12, 1
      %p93 = por %p91, %p92
      %p94 = scmp.ne.s32.totalorder %s86, %s89
      %p95 = scmp.eq.s32.totalorder %s12, 0
      %p96 = por %p94, %p95
      %p97 = scmp.ne.s32.totalorder %s86, %s89
      %p98 = scmp.eq.s32.totalorder %s17, 1
      %p99 = por %p97, %p98
      %p100 = scmp.ne.s32.totalorder %s89, %s90
      %p101 = scmp.eq.s32.totalorder %s17, 0
      %p102 = por %p100, %p101
      %p103 = scmp.ne.s32.totalorder %s89, %s90
      %p104 = scmp.eq.s32.totalorder %s18, 1
      %p105 = por %p103, %p104
      %p107 = scmp.ne.s32.totalorder %s90, %s106
      %p108 = scmp.eq.s32.totalorder %s18, 0
      %p109 = por %p107, %p108
      %s110 = ssub.s32 %s19, %s31
      %s111 = ssub.s32 %s20, %s27
      %s112 = sor.u32 %s110, %s111
      %p113 = scmp.eq.s32.totalorder %s112, 0
      %s115 = sadd.s32 %s114, 1
      %s116 = scalar_select %p113, %s114, %s115
      %p119 = pneg %p113
      %p120 = scmp.eq.s32.totalorder %s12, 1
      %p121 = por %p119, %p120
      %p122 = scmp.ne.s32.totalorder %s114, %s117
      %p123 = scmp.eq.s32.totalorder %s12, 0
      %p124 = por %p122, %p123
      %p125 = scmp.ne.s32.totalorder %s114, %s117
      %p126 = scmp.eq.s32.totalorder %s17, 1
      %p127 = por %p125, %p126
      %p128 = scmp.ne.s32.totalorder %s117, %s118
      %p129 = scmp.eq.s32.totalorder %s17, 0
      %p130 = por %p128, %p129
      %p131 = scmp.ne.s32.totalorder %s117, %s118
      %p132 = scmp.eq.s32.totalorder %s18, 1
      %p133 = por %p131, %p132
      %p135 = scmp.ne.s32.totalorder %s118, %s134
      %p136 = scmp.eq.s32.totalorder %s18, 0
      %p137 = por %p135, %p136
      %p138 = scmp.le.s32.totalorder 1, %s12
      %p139 = scmp.lt.s32.totalorder %s12, 3
      %p140 = pnand %p138, %p139
      %p141 = pneg %p140
      // Predicated region
      $region9: #{lite_attention.1} parent=5 // pred_check
        _
      $region10: #{lite_attention.1} parent=5 // pred_check_branch
        %143 = sbr.rel (%p140) target = $region12
      $region11: #{lite_attention.1} parent=5 // pred_region
        %s144 = ssub.s32 %s12, 1
        // Predicated region
        $region13: #{lite_attention.1} parent=11 // pred_check
          %p145 = pneg %p76
        $region14: #{lite_attention.1} parent=11 // pred_check_branch
          %147 = sbr.rel (%p145) target = $region16
        $region15: #{lite_attention.1} parent=11 // pred_region
          %p148 = scmp.lt.s32.totalorder %s22, 0
          %s149 = scalar_select %p148, %s22, 0
          %s150 = smul.addr %s149, 8
          %s151 = scalar_lea.vmem %s1, %s150
        $region16: #{lite_attention.1} parent=11 // pred_fallthru
          _
        // Predicated region
        $region17: #{lite_attention.1} parent=11 // pred_check
          %p152 = pneg %p102
        $region18: #{lite_attention.1} parent=11 // pred_check_branch
          %154 = sbr.rel (%p152) target = $region20
        $region19: #{lite_attention.1} parent=11 // pred_region
          %p155 = scmp.lt.s32.totalorder %s22, 0
          %s156 = scalar_select %p155, %s22, 0
          %s157 = scalar_lea.vmem %s2, %s156
        $region20: #{lite_attention.1} parent=11 // pred_fallthru
          _
      $region12: #{lite_attention.1} parent=5 // pred_fallthru
        _
      %p158 = scmp.lt.s32.totalorder %s12, 2
      // Predicated region
      $region21: #{lite_attention.1} parent=5 // pred_check
        %p159 = pneg %p158
      $region22: #{lite_attention.1} parent=5 // pred_check_branch
        %161 = sbr.rel (%p159) target = $region24
      $region23: #{lite_attention.1} parent=5 // pred_region
        // Predicated region
        $region25: #{lite_attention.1} parent=23 // pred_check
          %p162 = pneg %p44
        $region26: #{lite_attention.1} parent=23 // pred_check_branch
          %164 = sbr.rel (%p162) target = $region28
        $region27: #{lite_attention.1} parent=23 // pred_region
          %p165 = scmp.lt.s32.totalorder %s19, 1
          %s166 = scalar_select %p165, %s19, 1
          %s167 = smul.addr %s166, 8
          %s168 = scalar_lea.vmem %s0, %s167
        $region28: #{lite_attention.1} parent=23 // pred_fallthru
          _
      $region24: #{lite_attention.1} parent=5 // pred_fallthru
        _
      %p169 = scmp.le.s32.totalorder 1, %s12
      %p170 = scmp.lt.s32.totalorder %s12, 3
      %p171 = pnand %p169, %p170
      %p172 = pneg %p171
      // Predicated region
      $region29: #{lite_attention.1} parent=5 // pred_check
        _
      $region30: #{lite_attention.1} parent=5 // pred_check_branch
        %174 = sbr.rel (%p171) target = $region32
      $region31: #{lite_attention.1} parent=5 // pred_region
        %s175 = ssub.s32 %s12, 1
        %p176 = scmp.lt.s32.totalorder %s21, 1
        %s177 = scalar_select %p176, %s21, 1
        %s178 = smul.addr %s177, 8
        %s179 = scalar_lea.vmem %s0, %s178
        %p180 = pneg %p50
        %p181 = pneg %p47
        %p182 = scmp.lt.s32.totalorder %s22, 0
        %s183 = scalar_select %p182, %s22, 0
        %s184 = smul.addr %s183, 8
        %s185 = scalar_lea.vmem %s1, %s184
        %p186 = pneg %p76
        %p187 = pneg %p73
        %p188 = scmp.lt.s32.totalorder %s22, 0
        %s189 = scalar_select %p188, %s22, 0
        %s190 = scalar_lea.vmem %s2, %s189
        %p191 = pneg %p102
        %p192 = pneg %p99
        %p193 = pneg %p130
        %p194 = pneg %p127
        %s195 = sand.u32 %s117, 1
        %s196 = scalar_lea.sflag [#allocation3], %s195
        %s197 = sand.u32 %s117, 1
        %s198 = smul.addr %s197, 8
        %s199 = scalar_lea.vmem [#allocation2], %s198
        %p200 = scmp.lt.s32.totalorder %s21, 1
        %s201 = scalar_select %p200, %s21, 1
        %s202 = smul.addr %s201, 8
        %s203 = scalar_lea.vmem %s0, %s202
        %p204 = scmp.lt.s32.totalorder %s22, 0
        %s205 = scalar_select %p204, %s22, 0
        %s206 = smul.addr %s205, 8
        %s207 = scalar_lea.vmem %s1, %s206
        %p208 = scmp.lt.s32.totalorder %s22, 0
        %s209 = scalar_select %p208, %s22, 0
        %s210 = scalar_lea.vmem %s2, %s209
        %v211 = vld [vmem:[%s203] sm:$0xff]
        %v212 = vld [vmem:[%s207] sm:$0xff]
        %v213 = vld [vmem:[%s207 + $0x8] sm:$0xff]
        %v214 = vld [vmem:[%s207 + $0x10] sm:$0xff]
        %v215 = vld [vmem:[%s207 + $0x18] sm:$0xff]
        %v216 = vld [vmem:[%s210] sm:$0x1]
        %v218 = vperm.slane %v216, 0
        %vm220 = vcmask 261120
        %v222 = vsel %vm220, %v211, 0
        %224 = vmatpush.msra.mxu0 0.0
        %225 = vmatpush.msra.mxu0 0.0
        %226 = vmatpush.msra.mxu0 0.0
        %227 = vmatpush.msra.mxu0 0.0
        %228 = vmatpush.msra.mxu0 0.0
        %229 = vmatpush.msra.mxu0 0.0
        %230 = vmatpush.msra.mxu0 0.0
        %231 = vmatpush.msra.mxu0 0.0
        %232 = vmatpush.msra.mxu0 0.0
        %233 = vmatpush.msra.mxu0 0.0
        %234 = vmatpush.msra.mxu0 0.0
        %235 = vmatpush.msra.mxu0 0.0
        %236 = vmatpush.msra.mxu0 %v215
        %237 = vmatpush.msra.mxu0 %v214
        %238 = vmatpush.msra.mxu0 %v213
        %239 = vmatpush.msra.mxu0 %v212
        %240 = vmatmul.f32.gmra.mxu0 %v222
        %v241 = vpop.f32.mrf.mxu0
        %v242 = vadd.f32 %v218, %v241
        %243 = vdwg.mxu0
        %v244 = vsel %vm220, %v242, -inf
        %v245 = vrot.slane %v244, 4
        %v246 = vmax.f32 %v244, %v245
        %v247 = vrot.slane %v246, 2
        %v248 = vmax.f32 %v246, %v247
        %v249 = vrot.slane %v248, 1
        %v250 = vmax.f32 %v248, %v249
        %v251 = vsub.f32 %v242, %v250
        %v252 = vmul.f32 %v251, 1.442695
        %v253 = vpow.pop %v252
        %v254 = vsel %vm220, %v253, 0.0
        %v255 = vrot.slane %v254, 4
        %v256 = vadd.f32 %v254, %v255
        %v257 = vrot.slane %v256, 2
        %v258 = vadd.f32 %v256, %v257
        %v259 = vrot.slane %v258, 1
        %v260 = vadd.f32 %v258, %v259
        %v261 = vrcp.pop %v260
        %v262 = vmul.f32 %v211, %v253
        %v263 = vmul.f32 %v262, %v261
        %264 = vst.msk [vmem:[%s199] sm:$0xff] %vm220, %v263
        %s265 = sand.u32 %s117, 1
        %s266 = scalar_lea.sflag [#allocation3], %s265
        %s267 = sand.u32 %s117, 1
        %s268 = smul.addr %s267, 8
        %s269 = scalar_lea.vmem [#allocation2], %s268
        // Predicated region
        $region33: #{lite_attention.1} parent=31 // pred_check
          %p270 = pneg %p127
        $region34: #{lite_attention.1} parent=31 // pred_check_branch
          %272 = sbr.rel (%p270) target = $region36
        $region35: #{lite_attention.1} parent=31 // pred_region
          %274 = vsyncadd %s266, 0
          %s275 = sadd.s32 %s22, %s21
          %s276 = smul.addr %s275, 8
          %s277 = scalar_lea.hbm %s3, %s276
          %s279 = sshll.u32 %s269, 4
          %s280 = int_to_ptr.vmem [resolvable:$true] %s279
          %s281 = sshll.u32 %s277, 4
          %s282 = int_to_ptr.hbm [resolvable:$true] %s281
          %284 = dma.vmem_to_hbm [thread:$0]  %s280, 128, %s282, %s266
        $region36: #{lite_attention.1} parent=31 // pred_fallthru
          _
      $region32: #{lite_attention.1} parent=5 // pred_fallthru
        _
      %p285 = scmp.le.s32.totalorder 2, %s12
      // Predicated region
      $region37: #{lite_attention.1} parent=5 // pred_check
        %p286 = pneg %p285
      $region38: #{lite_attention.1} parent=5 // pred_check_branch
        %288 = sbr.rel (%p286) target = $region40
      $region39: #{lite_attention.1} parent=5 // pred_region
        %s289 = ssub.s32 %s12, 2
        // Predicated region
        $region41: #{lite_attention.1} parent=39 // pred_check
          %p290 = pneg %p133
        $region42: #{lite_attention.1} parent=39 // pred_check_branch
          %292 = sbr.rel (%p290) target = $region44
        $region43: #{lite_attention.1} parent=39 // pred_region
          %s293 = sand.u32 %s118, 1
          %s294 = scalar_lea.sflag [#allocation3], %s293
          %s295 = sand.u32 %s118, 1
          %s296 = smul.addr %s295, 8
          %s297 = scalar_lea.vmem [#allocation2], %s296
          %299 = dma.done %s294, 128
        $region44: #{lite_attention.1} parent=39 // pred_fallthru
          _
      $region40: #{lite_attention.1} parent=5 // pred_fallthru
        _
    $region6: #{lite_attention.1} parent=1 // loop_footer
      %s16 = sadd.s32 1, %s12
    $region7: #{lite_attention.1} parent=1 // loop_footer_branch
      %11 = sbr.rel target = $region3
    $region8: #{lite_attention.1} parent=1 // loop_exit
      _
    %300 = vsyncpa [#allocation3], 1
    %s301 = scalar_lea.sflag [#allocation3], 1
    %302 = vsyncpa %s301, 1

</llo_original>
